<compile_context>
chip_gen: v6e
topology: v6e:2x2x1
jax: 0.10.0
libtpu: 0.0.40
codegen_flags: <defaults>
</compile_context>

<pallas_src>
import jax
import jax.numpy as jnp
from jax import lax
from jax.experimental import pallas as pl
from jax.experimental.pallas import tpu as pltpu

_LANE = 128
# Safe scoped-VMEM budget on every generation (v5e/v6e scoped defaults are
# 16/32 MiB; v7x physical VMEM is only 64 MiB -> stay well under it).
_VMEM_LIMIT_BYTES = 32 * 1024 * 1024


def _round_up(x, m):
    return ((x + m - 1) // m) * m


def _pick_tile(n, pref=128):
    # Biggest clean tile for the demo sizes; at realistic n raise toward
    # 256-512 on v5e/v6e and re-derive against v7x's 64 MiB VMEM budget.
    return pref if n % pref == 0 else n


# ---------------------------------------------------------------------------
# Stage 1: one GCN layer   out = (adj @ h) @ W + b   (gridded / pipelined)
# ---------------------------------------------------------------------------
def _gcn_layer_kernel(adj_ref, h_ref, w_ref, b_ref, out_ref, acc_ref):
    k = pl.program_id(1)

    @pl.when(k == 0)
    def _():
        acc_ref[...] = jnp.zeros_like(acc_ref)

    # (TM, TK) @ (TK, D_in): bf16 MXU inputs, f32 accumulation in VMEM scratch.
    acc_ref[...] += jnp.dot(adj_ref[...], h_ref[...],
                            preferred_element_type=jnp.float32)

    @pl.when(k == pl.num_programs(1) - 1)
    def _():
        # Fused epilogue once per row tile: project with W, add bias, store.
        # ((adj@h)@W == adj@(h@W) exactly; this association keeps the O(n^2)
        # matmul's width at D_in and avoids recomputing h@W for every row tile.)
        out_ref[...] = (
            jnp.dot(acc_ref[...], w_ref[...], preferred_element_type=jnp.float32)
            + b_ref[...]
        ).astype(out_ref.dtype)


def gcn_layer(adj, h, w, b, *, tm, tk):
    """adj: (n, n), h: (n, d_in) [already in MXU input dtype],
    w: (d_in, d_out) f32, b: (1, d_out) f32  ->  (n, d_out) f32."""
    n = adj.shape[0]
    d_in, d_out = w.shape
    grid = (n // tm, n // tk)
    return pl.pallas_call(
        _gcn_layer_kernel,
        out_shape=jax.ShapeDtypeStruct((n, d_out), jnp.float32),
        grid_spec=pltpu.PrefetchScalarGridSpec(
            num_scalar_prefetch=0,
            grid=grid,
            in_specs=[
                pl.BlockSpec((tm, tk), lambda i, k: (i, k)),       # adj tile (streamed)
                pl.BlockSpec((tk, d_in), lambda i, k: (k, 0)),     # h tile (streamed)
                pl.BlockSpec((d_in, d_out), lambda i, k: (0, 0)),  # W (VMEM-resident)
                pl.BlockSpec((1, d_out), lambda i, k: (0, 0)),     # b (VMEM-resident)
            ],
            out_specs=pl.BlockSpec((tm, d_out), lambda i, k: (i, 0)),
            scratch_shapes=[pltpu.VMEM((tm, d_in), jnp.float32)],
        ),
        compiler_params=pltpu.CompilerParams(
            dimension_semantics=("parallel", "arbitrary"),
            vmem_limit_bytes=_VMEM_LIMIT_BYTES,
        ),
    )(adj, h, w, b)


# ---------------------------------------------------------------------------
# Stage 2: soft k-means on row-L2-normalized embeddings (lane-dense padded K)
# ---------------------------------------------------------------------------
def _make_cluster_kernel(k, kp, d_embed, num_iter, cluster_temp):
    def kernel(embeds_ref, mu_ref, r_ref, dist_ref):
        h = embeds_ref[...]                    # (n, D) f32; cols >= d_embed are exactly 0
        # Row-L2 normalize; eps guards all-zero rows.
        data = h * lax.rsqrt(jnp.sum(h * h, axis=1, keepdims=True) + 1e-12)

        ncols = h.shape[1]
        col = lax.broadcasted_iota(jnp.int32, (1, ncols), 1)
        # data_aug: a literal 1.0 in padding column `d_embed` so ONE MXU
        # contraction yields both r.T @ data and the per-cluster soft counts.
        data_aug = data + jnp.where(col == d_embed, 1.0, 0.0).astype(jnp.float32)

        kcol = lax.broadcasted_iota(jnp.int32, (1, kp), 1)
        neg_mask = jnp.where(kcol < k, 0.0, -1e30).astype(jnp.float32)  # kill padded clusters

        # TODO(synk): reference seeds mu with sklearn KMeans centers (init=None
        # path); replaced with the first k normalized rows (padded rows zero).
        rows = lax.broadcasted_iota(jnp.int32, (kp, 1), 0)
        mu = jnp.where(rows < k, data[:kp, :], 0.0)

        def softmax_rows(scores):
            m = jnp.max(scores, axis=1, keepdims=True)
            e = jnp.exp(scores - m)
            return e / jnp.sum(e, axis=1, keepdims=True)

        def kmeans_step(mu):
            # Temperature folded into the (kp, D) mu; (1,1)/(0,0) contractions
            # feed the MXU without materializing transposes.
            scores = lax.dot_general(data, cluster_temp * mu,
                                     (((1,), (1,)), ((), ())),
                                     preferred_element_type=jnp.float32) + neg_mask
            r = softmax_rows(scores)                                   # (n, kp)
            stats = lax.dot_general(r, data_aug,                       # (kp, D): means + counts
                                    (((0,), (0,)), ((), ())),
                                    preferred_element_type=jnp.float32)
            counts = stats[:, d_embed:d_embed + 1]                     # (kp, 1) = sum_n r[n, j]
            # Exact reciprocal (feeds the next iteration); clamp guards empty clusters.
            return stats / jnp.maximum(counts, 1e-12)

        if num_iter <= 4:
            for _ in range(num_iter):        # small static trip count -> unroll
                mu = kmeans_step(mu)
        else:
            mu = lax.fori_loop(0, num_iter, lambda _, m: kmeans_step(m), mu)

        # dist is an unscaled output (matches the reference); r uses the
        # temperature-scaled, padded-cluster-masked scores.
        dist = lax.dot_general(data, mu, (((1,), (1,)), ((), ())),
                               preferred_element_type=jnp.float32)
        r = softmax_rows(cluster_temp * dist + neg_mask)

        mu_ref[...] = mu
        r_ref[...] = r
        dist_ref[...] = dist

    return kernel


def cluster_forward(embeds_pad, *, k, kp, d_embed, num_iter, cluster_temp):
    n, d_pad = embeds_pad.shape
    kernel = _make_cluster_kernel(k, kp, d_embed, num_iter, float(cluster_temp))
    vmem = pl.BlockSpec(memory_space=pltpu.MemorySpace.VMEM)
    return pl.pallas_call(
        kernel,
        out_shape=(
            jax.ShapeDtypeStruct((kp, d_pad), jnp.float32),   # mu (padded, lane-dense)
            jax.ShapeDtypeStruct((n, kp), jnp.float32),       # r  (lane-dense)
            jax.ShapeDtypeStruct((n, kp), jnp.float32),       # dist (lane-dense)
        ),
        in_specs=[vmem],
        out_specs=(vmem, vmem, vmem),
        compiler_params=pltpu.CompilerParams(vmem_limit_bytes=_VMEM_LIMIT_BYTES),
    )(embeds_pad)


# ---------------------------------------------------------------------------
# Module wrapper (parameter setup / padding is plain-JAX glue done at init)
# ---------------------------------------------------------------------------
class GCNClusterNet:
    """Forward-pass equivalent of the PyTorch GCNClusterNet.

    Parameters are created and zero-padded ONCE at __init__ into kernel layout:
    W as (d_in_pad, d_out_pad) with the real block in the corner, b as
    (1, d_out_pad).  `dropout` / sigmoid are stored only - the reference
    forward never applies them.
    """

    def __init__(self, network, dropout, K, cluster_temp, key,
                 mxu_dtype=jnp.bfloat16):
        self.network = list(network)
        self.dropout = dropout                 # stored only
        self.K = int(K)
        self.KP = _round_up(self.K, _LANE)     # lane-dense padded K
        self.cluster_temp = float(cluster_temp)
        self.mxu_dtype = mxu_dtype

        # Padded feature dims; the last keeps a spare column (>= d_embed + 1)
        # for the fused soft-count trick in the cluster kernel.
        self.dims_pad = [_round_up(d, _LANE) for d in self.network]
        self.dims_pad[-1] = _round_up(self.network[-1] + 1, _LANE)

        self.weights_raw, self.biases_raw = [], []
        self.weights, self.biases = [], []
        for idx in range(len(self.network) - 1):
            fan_in, fan_out = self.network[idx], self.network[idx + 1]
            fi_p, fo_p = self.dims_pad[idx], self.dims_pad[idx + 1]
            key, wk, bk = jax.random.split(key, 3)
            bound = 1.0 / float(fan_in) ** 0.5
            w = jax.random.uniform(wk, (fan_in, fan_out), jnp.float32, -bound, bound)
            b = jax.random.uniform(bk, (1, fan_out), jnp.float32, -bound, bound)
            self.weights_raw.append(w)
            self.biases_raw.append(b)
            self.weights.append(
                jnp.zeros((fi_p, fo_p), jnp.float32).at[:fan_in, :fan_out].set(w))
            self.biases.append(
                jnp.zeros((1, fo_p), jnp.float32).at[:, :fan_out].set(b))

    def __call__(self, x, adj, num_iter=1):
        n, d0 = x.shape
        assert adj.shape == (n, n)
        assert n >= self.KP, "cluster kernel's mu init slices the first KP(=128) rows"
        d_embed = self.network[-1]

        tm = _pick_tile(n)
        tk = _pick_tile(n)

        # Zero-pad features to lane-dense widths (cheap one-off XLA ops).
        x_pad = jnp.zeros((n, self.dims_pad[0]), jnp.float32).at[:, :d0].set(x)

        # TODO(synk): reference consumes a torch sparse adjacency (spmm); it is
        # consumed here as a dense (n, n) matrix streamed tile-by-tile in bf16.
        adj_mxu = adj.astype(self.mxu_dtype)

        h = x_pad
        for w, b in zip(self.weights, self.biases):
            h = gcn_layer(adj_mxu, h.astype(self.mxu_dtype), w, b, tm=tm, tk=tk)
        embeds_pad = h                                       # (n, d_pad) f32

        mu_pad, r_pad, dist_pad = cluster_forward(
            embeds_pad, k=self.K, kp=self.KP, d_embed=d_embed,
            num_iter=num_iter, cluster_temp=self.cluster_temp)

        # Un-pad (wrapper-side slices, lane-dense kernel outputs).
        mu = mu_pad[:self.K, :d_embed]
        r = r_pad[:, :self.K]
        dist = dist_pad[:, :self.K]
        embeds = embeds_pad[:, :d_embed]
        return mu, r, embeds, dist


# ---------------------------------------------------------------------------
# Pure-JAX reference (dtype-matched for the bf16 MXU-input path)
# ---------------------------------------------------------------------------
def ref_forward(x, adj, weights, biases, K, num_iter, cluster_temp, mxu_dtype):
    h = x
    for w, b in zip(weights, biases):
        ah = jnp.dot(adj.astype(mxu_dtype), h.astype(mxu_dtype),
                     preferred_element_type=jnp.float32)
        h = jnp.dot(ah, w, preferred_element_type=jnp.float32) + b
    data = h * lax.rsqrt(jnp.sum(h * h, axis=1, keepdims=True) + 1e-12)
    mu = data[:K]
    for _ in range(num_iter):
        dist = data @ mu.T
        r = jax.nn.softmax(cluster_temp * dist, axis=1)
        mu = (r.T @ data) / jnp.maximum(r.sum(axis=0)[:, None], 1e-12)
    dist = data @ mu.T
    r = jax.nn.softmax(cluster_temp * dist, axis=1)
    return mu, r, h, dist


def _check(name, got, want, atol, rtol):
    err = float(jnp.max(jnp.abs(got - want)))
    assert jnp.allclose(got, want, atol=atol, rtol=rtol), f"{name}: max|diff|={err}"


# ---------------------------------------------------------------------------
if __name__ == "__main__":
    key = jax.random.PRNGKey(0)
    key, xk, ak, pk = jax.random.split(key, 4)

    n = 256                    # small, but big enough for a real (2, 2) grid
    network = [16, 32, 8]      # [n_feat, n_hidden, n_embed] -> 2-layer GCN
    K = 4
    cluster_temp = 5.0
    num_iter = 2
    dropout = 0.5              # stored only; reference forward never applies it

    x = jax.random.normal(xk, (n, network[0]), jnp.float32)
    # Dense symmetric adjacency with self-loops, symmetrically normalized.
    a = (jax.random.uniform(ak, (n, n)) < 0.05).astype(jnp.float32)
    a = jnp.maximum(a, a.T) + jnp.eye(n, dtype=jnp.float32)
    d_inv_sqrt = lax.rsqrt(jnp.sum(a, axis=1))
    adj = a * d_inv_sqrt[:, None] * d_inv_sqrt[None, :]

    # --- exact-math run (f32 MXU inputs) vs pure-f32 reference: tight check ---
    model_f32 = GCNClusterNet(network, dropout, K, cluster_temp, pk,
                              mxu_dtype=jnp.float32)
    mu32, r32, emb32, dist32 = model_f32(x, adj, num_iter=num_iter)
    jax.block_until_ready((mu32, r32, emb32, dist32))
    ref32 = ref_forward(x, adj, model_f32.weights_raw, model_f32.biases_raw,
                        K, num_iter, cluster_temp, jnp.float32)
    for name, got, want in zip(("mu", "r", "embeds", "dist"),
                               (mu32, r32, emb32, dist32), ref32):
        _check(name + "_f32", got, want, atol=1e-4, rtol=1e-4)

    # --- default perf path: bf16 MXU inputs on the adjacency matmuls ---
    model = GCNClusterNet(network, dropout, K, cluster_temp, pk)  # bf16 default
    mu, r, embeds, dist = model(x, adj, num_iter=num_iter)
    jax.block_until_ready((mu, r, embeds, dist))

    assert mu.shape == (K, network[-1])
    assert r.shape == (n, K) and dist.shape == (n, K)
    assert embeds.shape == (n, network[-1])

    ref_bf = ref_forward(x, adj, model.weights_raw, model.biases_raw,
                         K, num_iter, cluster_temp, jnp.bfloat16)
    for name, got, want in zip(("mu", "r", "embeds", "dist"),
                               (mu, r, embeds, dist), ref_bf):
        _check(name + "_bf16", got, want, atol=1e-3, rtol=1e-3)

    print("KERNEL_OK")
</pallas_src>

<mosaic_0001>
module attributes {stable_mosaic.version = 11 : i64} {
  func.func @_gcn_layer_kernel(%arg0: i32, %arg1: i32, %arg2: memref<128x128xf32, #tpu.memory_space<vmem>>, %arg3: memref<128x128xf32, #tpu.memory_space<vmem>>, %arg4: memref<128x128xf32, #tpu.memory_space<vmem>>, %arg5: memref<1x128xf32, #tpu.memory_space<vmem>>, %arg6: memref<128x128xf32, #tpu.memory_space<vmem>>, %arg7: memref<128x128xf32, #tpu.memory_space<vmem>>) attributes {dimension_semantics = [#tpu.dimension_semantics<parallel>, #tpu.dimension_semantics<arbitrary>], iteration_bounds = array<i64: 2, 2>, scalar_prefetch = 0 : i64, scratch_operands = 1 : i64, tpu.core_type = #tpu.core_type<tc>, window_params = [{transform_indices = @transform_0, window_bounds = array<i64: 128, 128>}, {transform_indices = @transform_1, window_bounds = array<i64: 128, 128>}, {pipeline_mode = #tpu.pipeline_mode<synchronous>, transform_indices = @transform_2, window_bounds = array<i64: 128, 128>}, {pipeline_mode = #tpu.pipeline_mode<synchronous>, transform_indices = @transform_3, window_bounds = array<i64: 1, 128>}, {transform_indices = @transform_4, window_bounds = array<i64: 128, 128>}]} {
    %c0_i32 = arith.constant 0 : i32
    %0 = arith.cmpi eq, %arg1, %c0_i32 : i32
    %1 = arith.extui %0 : i1 to i32
    %c0_i32_0 = arith.constant 0 : i32
    %2 = arith.cmpi ne, %1, %c0_i32_0 : i32
    scf.if %2 {
      %cst_9 = arith.constant 0.000000e+00 : f32
      %12 = vector.broadcast %cst_9 : f32 to vector<128x128xf32>
      %c0_10 = arith.constant 0 : index
      %c0_11 = arith.constant 0 : index
      %13 = vector.load %arg7[%c0_10, %c0_11] : memref<128x128xf32, #tpu.memory_space<vmem>>, vector<128x128xf32>
      tpu.vector_store %arg7[%c0_10, %c0_11], %12 {strides = array<i32>} : memref<128x128xf32, #tpu.memory_space<vmem>>, vector<128x128xf32>,
    } else {
    }
    %c0 = arith.constant 0 : index
    %c0_1 = arith.constant 0 : index
    %3 = vector.load %arg7[%c0, %c0_1] : memref<128x128xf32, #tpu.memory_space<vmem>>, vector<128x128xf32>
    %c0_2 = arith.constant 0 : index
    %c0_3 = arith.constant 0 : index
    %4 = vector.load %arg2[%c0_2, %c0_3] : memref<128x128xf32, #tpu.memory_space<vmem>>, vector<128x128xf32>
    %c0_4 = arith.constant 0 : index
    %c0_5 = arith.constant 0 : index
    %5 = vector.load %arg3[%c0_4, %c0_5] : memref<128x128xf32, #tpu.memory_space<vmem>>, vector<128x128xf32>
    %cst = arith.constant dense<0.000000e+00> : vector<128x128xf32>
    %6 = tpu.matmul %4, %5, %cst {dimension_numbers = #tpu.dot_dimension_numbers<[1], [0], [0], [1], [0, 0, 1, 1], [], []>} : vector<128x128xf32>, vector<128x128xf32>, vector<128x128xf32> -> vector<128x128xf32>
    %7 = arith.addf %3, %6 : vector<128x128xf32>
    %c0_6 = arith.constant 0 : index
    %c0_7 = arith.constant 0 : index
    %8 = vector.load %arg7[%c0_6, %c0_7] : memref<128x128xf32, #tpu.memory_space<vmem>>, vector<128x128xf32>
    tpu.vector_store %arg7[%c0_6, %c0_7], %7 {strides = array<i32>} : memref<128x128xf32, #tpu.memory_space<vmem>>, vector<128x128xf32>,
    %c1_i32 = arith.constant 1 : i32
    %9 = arith.cmpi eq, %arg1, %c1_i32 : i32
    %10 = arith.extui %9 : i1 to i32
    %c0_i32_8 = arith.constant 0 : i32
    %11 = arith.cmpi ne, %10, %c0_i32_8 : i32
    scf.if %11 {
      %c0_9 = arith.constant 0 : index
      %c0_10 = arith.constant 0 : index
      %12 = vector.load %arg7[%c0_9, %c0_10] : memref<128x128xf32, #tpu.memory_space<vmem>>, vector<128x128xf32>
      %c0_11 = arith.constant 0 : index
      %c0_12 = arith.constant 0 : index
      %13 = vector.load %arg4[%c0_11, %c0_12] : memref<128x128xf32, #tpu.memory_space<vmem>>, vector<128x128xf32>
      %cst_13 = arith.constant dense<0.000000e+00> : vector<128x128xf32>
      %14 = tpu.matmul %12, %13, %cst_13 {dimension_numbers = #tpu.dot_dimension_numbers<[1], [0], [0], [1], [0, 0, 1, 1], [], []>} : vector<128x128xf32>, vector<128x128xf32>, vector<128x128xf32> -> vector<128x128xf32>
      %c0_14 = arith.constant 0 : index
      %c0_15 = arith.constant 0 : index
      %15 = vector.load %arg5[%c0_14, %c0_15] : memref<1x128xf32, #tpu.memory_space<vmem>>, vector<1x128xf32>
      %16 = vector.broadcast %15 : vector<1x128xf32> to vector<128x128xf32>
      %17 = arith.addf %14, %16 : vector<128x128xf32>
      %c0_16 = arith.constant 0 : index
      %c0_17 = arith.constant 0 : index
      %18 = vector.load %arg6[%c0_16, %c0_17] : memref<128x128xf32, #tpu.memory_space<vmem>>, vector<128x128xf32>
      tpu.vector_store %arg6[%c0_16, %c0_17], %17 {strides = array<i32>} : memref<128x128xf32, #tpu.memory_space<vmem>>, vector<128x128xf32>,
    } else {
    }
    return
  }
  func.func @transform_0(%arg0: i32, %arg1: i32) -> (i32, i32) {
    %c0_i32 = arith.constant 0 : i32
    return %arg0, %arg1 : i32, i32
  }
  func.func @transform_1(%arg0: i32, %arg1: i32) -> (i32, i32) {
    %c0_i32 = arith.constant 0 : i32
    %c0_i32_0 = arith.constant 0 : i32
    return %arg1, %c0_i32 : i32, i32
  }
  func.func @transform_2(%arg0: i32, %arg1: i32) -> (i32, i32) {
    %c0_i32 = arith.constant 0 : i32
    %c0_i32_0 = arith.constant 0 : i32
    %c0_i32_1 = arith.constant 0 : i32
    return %c0_i32, %c0_i32_0 : i32, i32
  }
  func.func @transform_3(%arg0: i32, %arg1: i32) -> (i32, i32) {
    %c0_i32 = arith.constant 0 : i32
    %c0_i32_0 = arith.constant 0 : i32
    %c0_i32_1 = arith.constant 0 : i32
    return %c0_i32, %c0_i32_0 : i32, i32
  }
  func.func @transform_4(%arg0: i32, %arg1: i32) -> (i32, i32) {
    %c0_i32 = arith.constant 0 : i32
    %c0_i32_0 = arith.constant 0 : i32
    return %arg0, %c0_i32 : i32, i32
  }
}

</mosaic_0001>

<llo_original>
// kernel: tpu_custom_call.1
$region0: #{tpu_custom_call.1}
  #allocation0 [shape = 'u32[]', space=smem, size = 0x4, offset = 0x4, fixed_abs, tag = 'smem constant byte address 0x4 - core index']
  #allocation1 [shape = 'u32[144,128]{1,0:T(1,128)}', space=vmem, size = 0x12000, scoped, tag = 'internal scratch']
  #allocation2 [shape = 'f32[128,128]{1,0:T(8,128)}', space=vmem, size = 0x10000, scoped, tag = 'scratch operand']
  %s0 = inlined_call_operand.hbm [shape: f32[256,256], index: 0, kind: input, shape index: {}]
  %s1 = inlined_call_operand.hbm [shape: f32[256,128], index: 1, kind: input, shape index: {}]
  %s2 = inlined_call_operand.hbm [shape: f32[128,128], index: 2, kind: input, shape index: {}]
  %s3 = inlined_call_operand.vmem [shape: f32[1,128], index: 3, kind: input, shape index: {}]
  %s4 = inlined_call_operand.hbm [shape: f32[256,128], index: 4, kind: output, shape index: {}]
  %s5 = sld [smem:[#allocation0]]
  $region69: #{tpu_custom_call.1} parent=0
    _
  %s7 = ssub.s32 1, %s5
  %s8 = scalar_select 0, %s7, %s5
  $region1: #{tpu_custom_call.1} parent=0
    #allocation3 [shape = 'u8[131072]{0}', space=vmem, size = 0x20000, scoped, tag = 'input window, operand 0']
    #allocation4 [shape = 's32[2]{0}', space=sflag, size = 0x8, scoped, tag = 'scoped memory for tpu_custom_call.1']
    #allocation5 [shape = 's32[2]{0}', space=sflag, size = 0x8, scoped, tag = 'scoped memory for tpu_custom_call.1']
    #allocation6 [shape = 'u8[131072]{0}', space=vmem, size = 0x20000, scoped, tag = 'input window, operand 1']
    #allocation7 [shape = 's32[2]{0}', space=sflag, size = 0x8, scoped, tag = 'scoped memory for tpu_custom_call.1']
    #allocation8 [shape = 'u8[65536]{0}', space=vmem, size = 0x10000, scoped, tag = 'input window, operand 2, single buffered']
    #allocation9 [shape = 'u8[131072]{0}', space=vmem, size = 0x20000, scoped, tag = 'output window, operand 0']
    %9 = vsyncpa [#allocation4], 0
    %s10 = scalar_lea.sflag [#allocation4], 1
    %11 = vsyncpa %s10, 0
    %12 = vsyncpa [#allocation7], 0
    %s13 = scalar_lea.sflag [#allocation7], 1
    %14 = vsyncpa %s13, 0
    %15 = vsyncpa [#allocation5], 0
    %s16 = scalar_lea.sflag [#allocation5], 1
    %17 = vsyncpa %s16, 0
    loop: start=0, step=1, limit=6
    $region2: #{tpu_custom_call.1} parent=1 // loop_pre_header
      _
    $region3: #{tpu_custom_call.1} parent=1 // loop_header
      %s19 = sphi 0, %s23
      %p20 = scmp.ge.s32.totalorder %s19, 6
      %s26 = sphi 0, %s38
      %s27 = sphi 0, %s34
      %s28 = sphi 0, %s26
      %s29 = sphi 0, %s27
      %s30 = sphi 0, %s28
      %s31 = sphi 0, %s29
      %s43 = sphi 0, %s45
      %s46 = sphi 0, %s43
      %s47 = sphi 0, %s46
      %s63 = sphi 0, %s47
      %s69 = sphi 0, %s71
      %s72 = sphi 0, %s69
      %s73 = sphi 0, %s72
      %s89 = sphi 0, %s73
      %s93 = sphi 0, %s93
      %s95 = sphi 0, %s93
      %s96 = sphi 0, %s95
      %s110 = sphi 0, %s96
      %s114 = sphi 0, %s114
      %s116 = sphi 0, %s114
      %s117 = sphi 0, %s116
      %s131 = sphi 0, %s117
      %s137 = sphi 0, %s139
      %s140 = sphi 0, %s137
      %s141 = sphi 0, %s140
      %s157 = sphi 0, %s141
    $region4: #{tpu_custom_call.1} parent=1 // loop_header_branch
      %22 = sbr.rel (%p20) target = $region8
    $region5: #{tpu_custom_call.1} parent=1 // loop_body
      %s24 = ssub.s32 %s19, 1
      %s25 = ssub.s32 %s19, 2
      %s32 = sadd.s32 1, %s27
      %p33 = scmp.ge.s32.totalorder %s32, 2
      %s34 = scalar_select %p33, 0, %s32
      %s35 = sadd.s32 1, %s26
      %s36 = scalar_select %p33, %s35, %s26
      %p37 = scmp.ge.s32.totalorder %s36, 2
      %s38 = scalar_select %p37, 0, %s36
      %s39 = ssub.s32 %s26, %s38
      %s40 = ssub.s32 %s27, %s34
      %s41 = sor.u32 %s39, %s40
      %p42 = scmp.eq.s32.totalorder %s41, 0
      %s44 = sadd.s32 %s43, 1
      %s45 = scalar_select %p42, %s43, %s44
      %p48 = pneg %p42
      %p49 = scmp.eq.s32.totalorder %s19, 3
      %p50 = por %p48, %p49
      %p51 = scmp.ne.s32.totalorder %s43, %s46
      %p52 = scmp.eq.s32.totalorder %s19, 0
      %p53 = por %p51, %p52
      %p54 = scmp.ne.s32.totalorder %s43, %s46
      %p55 = scmp.eq.s32.totalorder %s24, 3
      %p56 = por %p54, %p55
      %p57 = scmp.ne.s32.totalorder %s46, %s47
      %p58 = scmp.eq.s32.totalorder %s24, 0
      %p59 = por %p57, %p58
      %p60 = scmp.ne.s32.totalorder %s46, %s47
      %p61 = scmp.eq.s32.totalorder %s25, 3
      %p62 = por %p60, %p61
      %p64 = scmp.ne.s32.totalorder %s47, %s63
      %p65 = scmp.eq.s32.totalorder %s25, 0
      %p66 = por %p64, %p65
      %s67 = ssub.s32 %s27, %s34
      %p68 = scmp.eq.s32.totalorder %s67, 0
      %s70 = sadd.s32 %s69, 1
      %s71 = scalar_select %p68, %s69, %s70
      %p74 = pneg %p68
      %p75 = scmp.eq.s32.totalorder %s19, 3
      %p76 = por %p74, %p75
      %p77 = scmp.ne.s32.totalorder %s69, %s72
      %p78 = scmp.eq.s32.totalorder %s19, 0
      %p79 = por %p77, %p78
      %p80 = scmp.ne.s32.totalorder %s69, %s72
      %p81 = scmp.eq.s32.totalorder %s24, 3
      %p82 = por %p80, %p81
      %p83 = scmp.ne.s32.totalorder %s72, %s73
      %p84 = scmp.eq.s32.totalorder %s24, 0
      %p85 = por %p83, %p84
      %p86 = scmp.ne.s32.totalorder %s72, %s73
      %p87 = scmp.eq.s32.totalorder %s25, 3
      %p88 = por %p86, %p87
      %p90 = scmp.ne.s32.totalorder %s73, %s89
      %p91 = scmp.eq.s32.totalorder %s25, 0
      %p92 = por %p90, %p91
      %s94 = sadd.s32 %s93, 1
      %p97 = scmp.eq.s32.totalorder %s19, 3
      %p98 = scmp.ne.s32.totalorder %s93, %s95
      %p99 = scmp.eq.s32.totalorder %s19, 0
      %p100 = por %p98, %p99
      %p101 = scmp.ne.s32.totalorder %s93, %s95
      %p102 = scmp.eq.s32.totalorder %s24, 3
      %p103 = por %p101, %p102
      %p104 = scmp.ne.s32.totalorder %s95, %s96
      %p105 = scmp.eq.s32.totalorder %s24, 0
      %p106 = por %p104, %p105
      %p107 = scmp.ne.s32.totalorder %s95, %s96
      %p108 = scmp.eq.s32.totalorder %s25, 3
      %p109 = por %p107, %p108
      %p111 = scmp.ne.s32.totalorder %s96, %s110
      %p112 = scmp.eq.s32.totalorder %s25, 0
      %p113 = por %p111, %p112
      %s115 = sadd.s32 %s114, 1
      %p118 = scmp.eq.s32.totalorder %s19, 3
      %p119 = scmp.ne.s32.totalorder %s114, %s116
      %p120 = scmp.eq.s32.totalorder %s19, 0
      %p121 = por %p119, %p120
      %p122 = scmp.ne.s32.totalorder %s114, %s116
      %p123 = scmp.eq.s32.totalorder %s24, 3
      %p124 = por %p122, %p123
      %p125 = scmp.ne.s32.totalorder %s116, %s117
      %p126 = scmp.eq.s32.totalorder %s24, 0
      %p127 = por %p125, %p126
      %p128 = scmp.ne.s32.totalorder %s116, %s117
      %p129 = scmp.eq.s32.totalorder %s25, 3
      %p130 = por %p128, %p129
      %p132 = scmp.ne.s32.totalorder %s117, %s131
      %p133 = scmp.eq.s32.totalorder %s25, 0
      %p134 = por %p132, %p133
      %s135 = ssub.s32 %s26, %s38
      %p136 = scmp.eq.s32.totalorder %s135, 0
      %s138 = sadd.s32 %s137, 1
      %s139 = scalar_select %p136, %s137, %s138
      %p142 = pneg %p136
      %p143 = scmp.eq.s32.totalorder %s19, 3
      %p144 = por %p142, %p143
      %p145 = scmp.ne.s32.totalorder %s137, %s140
      %p146 = scmp.eq.s32.totalorder %s19, 0
      %p147 = por %p145, %p146
      %p148 = scmp.ne.s32.totalorder %s137, %s140
      %p149 = scmp.eq.s32.totalorder %s24, 3
      %p150 = por %p148, %p149
      %p151 = scmp.ne.s32.totalorder %s140, %s141
      %p152 = scmp.eq.s32.totalorder %s24, 0
      %p153 = por %p151, %p152
      %p154 = scmp.ne.s32.totalorder %s140, %s141
      %p155 = scmp.eq.s32.totalorder %s25, 3
      %p156 = por %p154, %p155
      %p158 = scmp.ne.s32.totalorder %s141, %s157
      %p159 = scmp.eq.s32.totalorder %s25, 0
      %p160 = por %p158, %p159
      %p161 = scmp.le.s32.totalorder 1, %s19
      %p162 = scmp.lt.s32.totalorder %s19, 5
      %p163 = pnand %p161, %p162
      %p164 = pneg %p163
      // Predicated region
      $region9: #{tpu_custom_call.1} parent=5 // pred_check
        _
      $region10: #{tpu_custom_call.1} parent=5 // pred_check_branch
        %166 = sbr.rel (%p163) target = $region12
      $region11: #{tpu_custom_call.1} parent=5 // pred_region
        %s167 = ssub.s32 %s19, 1
        // Predicated region
        $region13: #{tpu_custom_call.1} parent=11 // pred_check
          %p168 = pneg %p106
        $region14: #{tpu_custom_call.1} parent=11 // pred_check_branch
          %170 = sbr.rel (%p168) target = $region16
        $region15: #{tpu_custom_call.1} parent=11 // pred_region
          %s172 = ssub.s32 2048, 2048
          %173 = vsyncadd [#allocation7], %s172
          %s174 = sshll.u32 [#allocation8], 4
          %s175 = int_to_ptr.vmem [resolvable:$true] %s174
          %180 = dma.hbm_to_vmem [thread:$0]  %s2, 2048, %s175, [#allocation7], 128, 128, 8
        $region16: #{tpu_custom_call.1} parent=11 // pred_fallthru
          _
        // Predicated region
        $region17: #{tpu_custom_call.1} parent=11 // pred_check
          %p181 = pneg %p127
        $region18: #{tpu_custom_call.1} parent=11 // pred_check_branch
          %183 = sbr.rel (%p181) target = $region20
        $region19: #{tpu_custom_call.1} parent=11 // pred_region
          _
        $region20: #{tpu_custom_call.1} parent=11 // pred_fallthru
          _
      $region12: #{tpu_custom_call.1} parent=5 // pred_fallthru
        _
      %p184 = scmp.lt.s32.totalorder %s19, 4
      // Predicated region
      $region21: #{tpu_custom_call.1} parent=5 // pred_check
        %p185 = pneg %p184
      $region22: #{tpu_custom_call.1} parent=5 // pred_check_branch
        %187 = sbr.rel (%p185) target = $region24
      $region23: #{tpu_custom_call.1} parent=5 // pred_region
        // Predicated region
        $region25: #{tpu_custom_call.1} parent=23 // pred_check
          %p188 = pneg %p53
        $region26: #{tpu_custom_call.1} parent=23 // pred_check_branch
          %190 = sbr.rel (%p188) target = $region28
        $region27: #{tpu_custom_call.1} parent=23 // pred_region
          %s191 = sand.u32 %s43, 1
          %s192 = scalar_lea.sflag [#allocation4], %s191
          %s193 = sand.u32 %s43, 1
          %s194 = smul.addr %s193, 128
          %s195 = scalar_lea.vmem [#allocation3], %s194
          %s196 = smul.u32 16, %s26
          %s198 = ssub.s32 2048, 2048
          %199 = vsyncadd %s192, %s198
          %s200 = smul.addr %s196, 2
          %s201 = sadd.s32 %s27, %s200
          %s202 = smul.addr %s201, 128
          %s203 = scalar_lea.hbm %s0, %s202
          %s204 = sshll.u32 %s195, 4
          %s205 = int_to_ptr.vmem [resolvable:$true] %s204
          %210 = dma.hbm_to_vmem [thread:$0]  %s203, 2048, %s205, %s192, 256, 128, 8
        $region28: #{tpu_custom_call.1} parent=23 // pred_fallthru
          _
        // Predicated region
        $region29: #{tpu_custom_call.1} parent=23 // pred_check
          %p211 = pneg %p79
        $region30: #{tpu_custom_call.1} parent=23 // pred_check_branch
          %213 = sbr.rel (%p211) target = $region32
        $region31: #{tpu_custom_call.1} parent=23 // pred_region
          %s214 = sand.u32 %s19, 1
          %s215 = scalar_lea.sflag [#allocation7], %s214
          %s216 = sand.u32 %s69, 1
          %s217 = smul.addr %s216, 128
          %s218 = scalar_lea.vmem [#allocation6], %s217
          %s219 = smul.u32 16, %s27
          %s221 = ssub.s32 2048, 2048
          %222 = vsyncadd %s215, %s221
          %s223 = smul.addr %s219, 128
          %s224 = scalar_lea.hbm %s1, %s223
          %s225 = sshll.u32 %s218, 4
          %s226 = int_to_ptr.vmem [resolvable:$true] %s225
          %231 = dma.hbm_to_vmem [thread:$0]  %s224, 2048, %s226, %s215, 128, 128, 8
        $region32: #{tpu_custom_call.1} parent=23 // pred_fallthru
          _
      $region24: #{tpu_custom_call.1} parent=5 // pred_fallthru
        _
      %p232 = scmp.le.s32.totalorder 1, %s19
      %p233 = scmp.lt.s32.totalorder %s19, 5
      %p234 = pnand %p232, %p233
      %p235 = pneg %p234
      // Predicated region
      $region33: #{tpu_custom_call.1} parent=5 // pred_check
        _
      $region34: #{tpu_custom_call.1} parent=5 // pred_check_branch
        %237 = sbr.rel (%p234) target = $region36
      $region35: #{tpu_custom_call.1} parent=5 // pred_region
        %s238 = ssub.s32 %s19, 1
        %s239 = sand.u32 %s46, 1
        %s240 = scalar_lea.sflag [#allocation4], %s239
        %s241 = sand.u32 %s46, 1
        %s242 = smul.addr %s241, 128
        %s243 = scalar_lea.vmem [#allocation3], %s242
        // Predicated region
        $region37: #{tpu_custom_call.1} parent=35 // pred_check
          %p244 = pneg %p59
        $region38: #{tpu_custom_call.1} parent=35 // pred_check_branch
          %246 = sbr.rel (%p244) target = $region40
        $region39: #{tpu_custom_call.1} parent=35 // pred_region
          %247 = dma.done %s240, 2048
        $region40: #{tpu_custom_call.1} parent=35 // pred_fallthru
          _
        %s248 = sand.u32 %s24, 1
        %s249 = scalar_lea.sflag [#allocation7], %s248
        %s250 = sand.u32 %s72, 1
        %s251 = smul.addr %s250, 128
        %s252 = scalar_lea.vmem [#allocation6], %s251
        // Predicated region
        $region41: #{tpu_custom_call.1} parent=35 // pred_check
          %p253 = pneg %p85
        $region42: #{tpu_custom_call.1} parent=35 // pred_check_branch
          %255 = sbr.rel (%p253) target = $region44
        $region43: #{tpu_custom_call.1} parent=35 // pred_region
          %256 = dma.done %s249, 2048
        $region44: #{tpu_custom_call.1} parent=35 // pred_fallthru
          _
        // Predicated region
        $region45: #{tpu_custom_call.1} parent=35 // pred_check
          %p257 = pneg %p106
        $region46: #{tpu_custom_call.1} parent=35 // pred_check_branch
          %259 = sbr.rel (%p257) target = $region48
        $region47: #{tpu_custom_call.1} parent=35 // pred_region
          %260 = dma.done [#allocation7], 2048
        $region48: #{tpu_custom_call.1} parent=35 // pred_fallthru
          _
        %s261 = sand.u32 %s46, 1
        %s262 = scalar_lea.sflag [#allocation4], %s261
        %s263 = sand.u32 %s46, 1
        %s264 = smul.addr %s263, 128
        %s265 = scalar_lea.vmem [#allocation3], %s264
        %p266 = pneg %p59
        %p267 = pneg %p56
        %s268 = sand.u32 %s24, 1
        %s269 = scalar_lea.sflag [#allocation7], %s268
        %s270 = sand.u32 %s72, 1
        %s271 = smul.addr %s270, 128
        %s272 = scalar_lea.vmem [#allocation6], %s271
        %p273 = pneg %p85
        %p274 = pneg %p82
        %p275 = pneg %p106
        %p276 = pneg %p103
        %p277 = pneg %p127
        %p278 = pneg %p124
        %p279 = pneg %p153
        %p280 = pneg %p150
        %s281 = sand.u32 %s140, 1
        %s282 = scalar_lea.sflag [#allocation5], %s281
        %s283 = sand.u32 %s140, 1
        %s284 = smul.addr %s283, 128
        %s285 = scalar_lea.vmem [#allocation9], %s284
        %s286 = smul.u32 16, %s28
        %s287 = smul.u32 16, %s29
        %s288 = smul.u32 16, %s28
        %p289 = scmp.eq.s32.totalorder %s29, 0
        // Predicated region
        $region49: #{tpu_custom_call.1} parent=35 // pred_check
          %p290 = pneg %p289
        $region50: #{tpu_custom_call.1} parent=35 // pred_check_branch
          %292 = sbr.rel (%p290) target = $region52
        $region51: #{tpu_custom_call.1} parent=35 // pred_region
          %293 = vst [vmem:[#allocation2] sm:$0xff] 0.0
          %294 = vst [vmem:[#allocation2 + $0x8] sm:$0xff] 0.0
          %295 = vst [vmem:[#allocation2 + $0x10] sm:$0xff] 0.0
          %296 = vst [vmem:[#allocation2 + $0x18] sm:$0xff] 0.0
          %297 = vst [vmem:[#allocation2 + $0x20] sm:$0xff] 0.0
          %298 = vst [vmem:[#allocation2 + $0x28] sm:$0xff] 0.0
          %299 = vst [vmem:[#allocation2 + $0x30] sm:$0xff] 0.0
          %300 = vst [vmem:[#allocation2 + $0x38] sm:$0xff] 0.0
          %301 = vst [vmem:[#allocation2 + $0x40] sm:$0xff] 0.0
          %302 = vst [vmem:[#allocation2 + $0x48] sm:$0xff] 0.0
          %303 = vst [vmem:[#allocation2 + $0x50] sm:$0xff] 0.0
          %304 = vst [vmem:[#allocation2 + $0x58] sm:$0xff] 0.0
          %305 = vst [vmem:[#allocation2 + $0x60] sm:$0xff] 0.0
          %306 = vst [vmem:[#allocation2 + $0x68] sm:$0xff] 0.0
          %307 = vst [vmem:[#allocation2 + $0x70] sm:$0xff] 0.0
          %308 = vst [vmem:[#allocation2 + $0x78] sm:$0xff] 0.0
        $region52: #{tpu_custom_call.1} parent=35 // pred_fallthru
          _
        %v309 = vld [vmem:[#allocation2] sm:$0xff]
        %v310 = vld [vmem:[#allocation2 + $0x8] sm:$0xff]
        %v311 = vld [vmem:[#allocation2 + $0x10] sm:$0xff]
        %v312 = vld [vmem:[#allocation2 + $0x18] sm:$0xff]
        %v313 = vld [vmem:[#allocation2 + $0x20] sm:$0xff]
        %v314 = vld [vmem:[#allocation2 + $0x28] sm:$0xff]
        %v315 = vld [vmem:[#allocation2 + $0x30] sm:$0xff]
        %v316 = vld [vmem:[#allocation2 + $0x38] sm:$0xff]
        %v317 = vld [vmem:[#allocation2 + $0x40] sm:$0xff]
        %v318 = vld [vmem:[#allocation2 + $0x48] sm:$0xff]
        %v319 = vld [vmem:[#allocation2 + $0x50] sm:$0xff]
        %v320 = vld [vmem:[#allocation2 + $0x58] sm:$0xff]
        %v321 = vld [vmem:[#allocation2 + $0x60] sm:$0xff]
        %v322 = vld [vmem:[#allocation2 + $0x68] sm:$0xff]
        %v323 = vld [vmem:[#allocation2 + $0x70] sm:$0xff]
        %v324 = vld [vmem:[#allocation2 + $0x78] sm:$0xff]
        %v325 = vld [vmem:[%s243] sm:$0xff]
        %v326 = vld [vmem:[%s243 + $0x8] sm:$0xff]
        %v327 = vld [vmem:[%s243 + $0x10] sm:$0xff]
        %v328 = vld [vmem:[%s243 + $0x18] sm:$0xff]
        %v329 = vld [vmem:[%s243 + $0x20] sm:$0xff]
        %v330 = vld [vmem:[%s243 + $0x28] sm:$0xff]
        %v331 = vld [vmem:[%s243 + $0x30] sm:$0xff]
        %v332 = vld [vmem:[%s243 + $0x38] sm:$0xff]
        %v333 = vld [vmem:[%s243 + $0x40] sm:$0xff]
        %v334 = vld [vmem:[%s243 + $0x48] sm:$0xff]
        %v335 = vld [vmem:[%s243 + $0x50] sm:$0xff]
        %v336 = vld [vmem:[%s243 + $0x58] sm:$0xff]
        %v337 = vld [vmem:[%s243 + $0x60] sm:$0xff]
        %v338 = vld [vmem:[%s243 + $0x68] sm:$0xff]
        %v339 = vld [vmem:[%s243 + $0x70] sm:$0xff]
        %v340 = vld [vmem:[%s243 + $0x78] sm:$0xff]
        %v341 = vld [vmem:[%s252] sm:$0xff]
        %v342 = vld [vmem:[%s252 + $0x8] sm:$0xff]
        %v343 = vld [vmem:[%s252 + $0x10] sm:$0xff]
        %v344 = vld [vmem:[%s252 + $0x18] sm:$0xff]
        %v345 = vld [vmem:[%s252 + $0x20] sm:$0xff]
        %v346 = vld [vmem:[%s252 + $0x28] sm:$0xff]
        %v347 = vld [vmem:[%s252 + $0x30] sm:$0xff]
        %v348 = vld [vmem:[%s252 + $0x38] sm:$0xff]
        %v349 = vld [vmem:[%s252 + $0x40] sm:$0xff]
        %v350 = vld [vmem:[%s252 + $0x48] sm:$0xff]
        %v351 = vld [vmem:[%s252 + $0x50] sm:$0xff]
        %v352 = vld [vmem:[%s252 + $0x58] sm:$0xff]
        %v353 = vld [vmem:[%s252 + $0x60] sm:$0xff]
        %v354 = vld [vmem:[%s252 + $0x68] sm:$0xff]
        %v355 = vld [vmem:[%s252 + $0x70] sm:$0xff]
        %v356 = vld [vmem:[%s252 + $0x78] sm:$0xff]
        %357 = vmatprep.subr.mxu0 0.0
        %358 = vmatpush1.msra.mxu0 %v356
        %359 = vmatprep.subr.mxu0 0.0
        %360 = vmatpush1.msra.mxu0 %v355
        %361 = vmatprep.subr.mxu0 0.0
        %362 = vmatpush1.msra.mxu0 %v354
        %363 = vmatprep.subr.mxu0 0.0
        %364 = vmatpush1.msra.mxu0 %v353
        %365 = vmatprep.subr.mxu0 0.0
        %366 = vmatpush1.msra.mxu0 %v352
        %367 = vmatprep.subr.mxu0 0.0
        %368 = vmatpush1.msra.mxu0 %v351
        %369 = vmatprep.subr.mxu0 0.0
        %370 = vmatpush1.msra.mxu0 %v350
        %371 = vmatprep.subr.mxu0 0.0
        %372 = vmatpush1.msra.mxu0 %v349
        %373 = vmatprep.subr.mxu0 0.0
        %374 = vmatpush1.msra.mxu0 %v348
        %375 = vmatprep.subr.mxu0 0.0
        %376 = vmatpush1.msra.mxu0 %v347
        %377 = vmatprep.subr.mxu0 0.0
        %378 = vmatpush1.msra.mxu0 %v346
        %379 = vmatprep.subr.mxu0 0.0
        %380 = vmatpush1.msra.mxu0 %v345
        %381 = vmatprep.subr.mxu0 0.0
        %382 = vmatpush1.msra.mxu0 %v344
        %383 = vmatprep.subr.mxu0 0.0
        %384 = vmatpush1.msra.mxu0 %v343
        %385 = vmatprep.subr.mxu0 0.0
        %386 = vmatpush1.msra.mxu0 %v342
        %387 = vmatprep.subr.mxu0 0.0
        %388 = vmatpush1.msra.mxu0 %v341
        %389 = vmatprep.subr.mxu0 0.0
        %390 = vmatpush2.msra.mxu0 0.0
        %391 = vmatprep.subr.mxu0 0.0
        %392 = vmatpush2.msra.mxu0 0.0
        %393 = vmatprep.subr.mxu0 0.0
        %394 = vmatpush2.msra.mxu0 0.0
        %395 = vmatprep.subr.mxu0 0.0
        %396 = vmatpush2.msra.mxu0 0.0
        %397 = vmatprep.subr.mxu0 0.0
        %398 = vmatpush2.msra.mxu0 0.0
        %399 = vmatprep.subr.mxu0 0.0
        %400 = vmatpush2.msra.mxu0 0.0
        %401 = vmatprep.subr.mxu0 0.0
        %402 = vmatpush2.msra.mxu0 0.0
        %403 = vmatprep.subr.mxu0 0.0
        %404 = vmatpush2.msra.mxu0 0.0
        %405 = vmatprep.subr.mxu0 0.0
        %406 = vmatpush2.msra.mxu0 0.0
        %407 = vmatprep.subr.mxu0 0.0
        %408 = vmatpush2.msra.mxu0 0.0
        %409 = vmatprep.subr.mxu0 0.0
        %410 = vmatpush2.msra.mxu0 0.0
        %411 = vmatprep.subr.mxu0 0.0
        %412 = vmatpush2.msra.mxu0 0.0
        %413 = vmatprep.subr.mxu0 0.0
        %414 = vmatpush2.msra.mxu0 0.0
        %415 = vmatprep.subr.mxu0 0.0
        %416 = vmatpush2.msra.mxu0 0.0
        %417 = vmatprep.subr.mxu0 0.0
        %418 = vmatpush2.msra.mxu0 0.0
        %419 = vmatprep.subr.mxu0 0.0
        %420 = vmatpush2.msra.mxu0 0.0
        %421 = vmatprep.mubr.f32.mxu0 0.0
        %422 = vmatmul.mubr.f32.gmra.mxu0 %v325
        %v423 = vpop.f32.mrf.mxu0
        %v424 = vadd.f32 0.0, %v423
        %v425 = vpop.f32.mrf.mxu0
        %426 = vmatprep.mubr.f32.mxu0 0.0
        %427 = vmatmul.mubr.f32.gmra.mxu0 %v326
        %v428 = vpop.f32.mrf.mxu0
        %v429 = vadd.f32 0.0, %v428
        %v430 = vpop.f32.mrf.mxu0
        %431 = vmatprep.mubr.f32.mxu0 0.0
        %432 = vmatmul.mubr.f32.gmra.mxu0 %v327
        %v433 = vpop.f32.mrf.mxu0
        %v434 = vadd.f32 0.0, %v433
        %v435 = vpop.f32.mrf.mxu0
        %436 = vmatprep.mubr.f32.mxu0 0.0
        %437 = vmatmul.mubr.f32.gmra.mxu0 %v328
        %v438 = vpop.f32.mrf.mxu0
        %v439 = vadd.f32 0.0, %v438
        %v440 = vpop.f32.mrf.mxu0
        %441 = vmatprep.mubr.f32.mxu0 0.0
        %442 = vmatmul.mubr.f32.gmra.mxu0 %v329
        %v443 = vpop.f32.mrf.mxu0
        %v444 = vadd.f32 0.0, %v443
        %v445 = vpop.f32.mrf.mxu0
        %446 = vmatprep.mubr.f32.mxu0 0.0
        %447 = vmatmul.mubr.f32.gmra.mxu0 %v330
        %v448 = vpop.f32.mrf.mxu0
        %v449 = vadd.f32 0.0, %v448
        %v450 = vpop.f32.mrf.mxu0
        %451 = vmatprep.mubr.f32.mxu0 0.0
        %452 = vmatmul.mubr.f32.gmra.mxu0 %v331
        %v453 = vpop.f32.mrf.mxu0
        %v454 = vadd.f32 0.0, %v453
        %v455 = vpop.f32.mrf.mxu0
        %456 = vmatprep.mubr.f32.mxu0 0.0
        %457 = vmatmul.mubr.f32.gmra.mxu0 %v332
        %v458 = vpop.f32.mrf.mxu0
        %v459 = vadd.f32 0.0, %v458
        %v460 = vpop.f32.mrf.mxu0
        %461 = vmatprep.mubr.f32.mxu0 0.0
        %462 = vmatmul.mubr.f32.gmra.mxu0 %v333
        %v463 = vpop.f32.mrf.mxu0
        %v464 = vadd.f32 0.0, %v463
        %v465 = vpop.f32.mrf.mxu0
        %466 = vmatprep.mubr.f32.mxu0 0.0
        %467 = vmatmul.mubr.f32.gmra.mxu0 %v334
        %v468 = vpop.f32.mrf.mxu0
        %v469 = vadd.f32 0.0, %v468
        %v470 = vpop.f32.mrf.mxu0
        %471 = vmatprep.mubr.f32.mxu0 0.0
        %472 = vmatmul.mubr.f32.gmra.mxu0 %v335
        %v473 = vpop.f32.mrf.mxu0
        %v474 = vadd.f32 0.0, %v473
        %v475 = vpop.f32.mrf.mxu0
        %476 = vmatprep.mubr.f32.mxu0 0.0
        %477 = vmatmul.mubr.f32.gmra.mxu0 %v336
        %v478 = vpop.f32.mrf.mxu0
        %v479 = vadd.f32 0.0, %v478
        %v480 = vpop.f32.mrf.mxu0
        %481 = vmatprep.mubr.f32.mxu0 0.0
        %482 = vmatmul.mubr.f32.gmra.mxu0 %v337
        %v483 = vpop.f32.mrf.mxu0
        %v484 = vadd.f32 0.0, %v483
        %v485 = vpop.f32.mrf.mxu0
        %486 = vmatprep.mubr.f32.mxu0 0.0
        %487 = vmatmul.mubr.f32.gmra.mxu0 %v338
        %v488 = vpop.f32.mrf.mxu0
        %v489 = vadd.f32 0.0, %v488
        %v490 = vpop.f32.mrf.mxu0
        %491 = vmatprep.mubr.f32.mxu0 0.0
        %492 = vmatmul.mubr.f32.gmra.mxu0 %v339
        %v493 = vpop.f32.mrf.mxu0
        %v494 = vadd.f32 0.0, %v493
        %v495 = vpop.f32.mrf.mxu0
        %496 = vmatprep.mubr.f32.mxu0 0.0
        %497 = vmatmul.mubr.f32.gmra.mxu0 %v340
        %v498 = vpop.f32.mrf.mxu0
        %v499 = vadd.f32 0.0, %v498
        %v500 = vpop.f32.mrf.mxu0
        %501 = vdwg.mxu0
        %v502 = vadd.f32 %v309, %v424
        %v503 = vadd.f32 %v310, %v429
        %v504 = vadd.f32 %v311, %v434
        %v505 = vadd.f32 %v312, %v439
        %v506 = vadd.f32 %v313, %v444
        %v507 = vadd.f32 %v314, %v449
        %v508 = vadd.f32 %v315, %v454
        %v509 = vadd.f32 %v316, %v459
        %v510 = vadd.f32 %v317, %v464
        %v511 = vadd.f32 %v318, %v469
        %v512 = vadd.f32 %v319, %v474
        %v513 = vadd.f32 %v320, %v479
        %v514 = vadd.f32 %v321, %v484
        %v515 = vadd.f32 %v322, %v489
        %v516 = vadd.f32 %v323, %v494
        %v517 = vadd.f32 %v324, %v499
        %518 = vst [vmem:[#allocation2] sm:$0xff] %v502
        %519 = vst [vmem:[#allocation2 + $0x8] sm:$0xff] %v503
        %520 = vst [vmem:[#allocation2 + $0x10] sm:$0xff] %v504
        %521 = vst [vmem:[#allocation2 + $0x18] sm:$0xff] %v505
        %522 = vst [vmem:[#allocation2 + $0x20] sm:$0xff] %v506
        %523 = vst [vmem:[#allocation2 + $0x28] sm:$0xff] %v507
        %524 = vst [vmem:[#allocation2 + $0x30] sm:$0xff] %v508
        %525 = vst [vmem:[#allocation2 + $0x38] sm:$0xff] %v509
        %526 = vst [vmem:[#allocation2 + $0x40] sm:$0xff] %v510
        %527 = vst [vmem:[#allocation2 + $0x48] sm:$0xff] %v511
        %528 = vst [vmem:[#allocation2 + $0x50] sm:$0xff] %v512
        %529 = vst [vmem:[#allocation2 + $0x58] sm:$0xff] %v513
        %530 = vst [vmem:[#allocation2 + $0x60] sm:$0xff] %v514
        %531 = vst [vmem:[#allocation2 + $0x68] sm:$0xff] %v515
        %532 = vst [vmem:[#allocation2 + $0x70] sm:$0xff] %v516
        %533 = vst [vmem:[#allocation2 + $0x78] sm:$0xff] %v517
        %p534 = scmp.eq.s32.totalorder %s29, 1
        // Predicated region
        $region53: #{tpu_custom_call.1} parent=35 // pred_check
          %p535 = pneg %p534
        $region54: #{tpu_custom_call.1} parent=35 // pred_check_branch
          %537 = sbr.rel (%p535) target = $region56
        $region55: #{tpu_custom_call.1} parent=35 // pred_region
          %v538 = vld [vmem:[#allocation2] sm:$0xff]
          %v539 = vld [vmem:[#allocation2 + $0x8] sm:$0xff]
          %v540 = vld [vmem:[#allocation2 + $0x10] sm:$0xff]
          %v541 = vld [vmem:[#allocation2 + $0x18] sm:$0xff]
          %v542 = vld [vmem:[#allocation2 + $0x20] sm:$0xff]
          %v543 = vld [vmem:[#allocation2 + $0x28] sm:$0xff]
          %v544 = vld [vmem:[#allocation2 + $0x30] sm:$0xff]
          %v545 = vld [vmem:[#allocation2 + $0x38] sm:$0xff]
          %v546 = vld [vmem:[#allocation2 + $0x40] sm:$0xff]
          %v547 = vld [vmem:[#allocation2 + $0x48] sm:$0xff]
          %v548 = vld [vmem:[#allocation2 + $0x50] sm:$0xff]
          %v549 = vld [vmem:[#allocation2 + $0x58] sm:$0xff]
          %v550 = vld [vmem:[#allocation2 + $0x60] sm:$0xff]
          %v551 = vld [vmem:[#allocation2 + $0x68] sm:$0xff]
          %v552 = vld [vmem:[#allocation2 + $0x70] sm:$0xff]
          %v553 = vld [vmem:[#allocation2 + $0x78] sm:$0xff]
          %v554 = vld [vmem:[#allocation8] sm:$0xff]
          %v555 = vld [vmem:[#allocation8 + $0x8] sm:$0xff]
          %v556 = vld [vmem:[#allocation8 + $0x10] sm:$0xff]
          %v557 = vld [vmem:[#allocation8 + $0x18] sm:$0xff]
          %v558 = vld [vmem:[#allocation8 + $0x20] sm:$0xff]
          %v559 = vld [vmem:[#allocation8 + $0x28] sm:$0xff]
          %v560 = vld [vmem:[#allocation8 + $0x30] sm:$0xff]
          %v561 = vld [vmem:[#allocation8 + $0x38] sm:$0xff]
          %v562 = vld [vmem:[#allocation8 + $0x40] sm:$0xff]
          %v563 = vld [vmem:[#allocation8 + $0x48] sm:$0xff]
          %v564 = vld [vmem:[#allocation8 + $0x50] sm:$0xff]
          %v565 = vld [vmem:[#allocation8 + $0x58] sm:$0xff]
          %v566 = vld [vmem:[#allocation8 + $0x60] sm:$0xff]
          %v567 = vld [vmem:[#allocation8 + $0x68] sm:$0xff]
          %v568 = vld [vmem:[#allocation8 + $0x70] sm:$0xff]
          %v569 = vld [vmem:[#allocation8 + $0x78] sm:$0xff]
          %v570 = vld [vmem:[%s3] sm:$0x1]
          %v572 = vlaneseq
          %v573 = vshrl.u32 %v572, 7
          %v574 = vsub.s32 0, %v573
          %v575 = vrot.slane %v570, %v574
          %577 = vmatprep.subr.mxu0 0.0
          %578 = vmatpush1.msra.mxu0 %v569
          %579 = vmatprep.subr.mxu0 0.0
          %580 = vmatpush1.msra.mxu0 %v568
          %581 = vmatprep.subr.mxu0 0.0
          %582 = vmatpush1.msra.mxu0 %v567
          %583 = vmatprep.subr.mxu0 0.0
          %584 = vmatpush1.msra.mxu0 %v566
          %585 = vmatprep.subr.mxu0 0.0
          %586 = vmatpush1.msra.mxu0 %v565
          %587 = vmatprep.subr.mxu0 0.0
          %588 = vmatpush1.msra.mxu0 %v564
          %589 = vmatprep.subr.mxu0 0.0
          %590 = vmatpush1.msra.mxu0 %v563
          %591 = vmatprep.subr.mxu0 0.0
          %592 = vmatpush1.msra.mxu0 %v562
          %593 = vmatprep.subr.mxu0 0.0
          %594 = vmatpush1.msra.mxu0 %v561
          %595 = vmatprep.subr.mxu0 0.0
          %596 = vmatpush1.msra.mxu0 %v560
          %597 = vmatprep.subr.mxu0 0.0
          %598 = vmatpush1.msra.mxu0 %v559
          %599 = vmatprep.subr.mxu0 0.0
          %600 = vmatpush1.msra.mxu0 %v558
          %601 = vmatprep.subr.mxu0 0.0
          %602 = vmatpush1.msra.mxu0 %v557
          %603 = vmatprep.subr.mxu0 0.0
          %604 = vmatpush1.msra.mxu0 %v556
          %605 = vmatprep.subr.mxu0 0.0
          %606 = vmatpush1.msra.mxu0 %v555
          %607 = vmatprep.subr.mxu0 0.0
          %608 = vmatpush1.msra.mxu0 %v554
          %609 = vmatprep.subr.mxu0 0.0
          %610 = vmatpush2.msra.mxu0 0.0
          %611 = vmatprep.subr.mxu0 0.0
          %612 = vmatpush2.msra.mxu0 0.0
          %613 = vmatprep.subr.mxu0 0.0
          %614 = vmatpush2.msra.mxu0 0.0
          %615 = vmatprep.subr.mxu0 0.0
          %616 = vmatpush2.msra.mxu0 0.0
          %617 = vmatprep.subr.mxu0 0.0
          %618 = vmatpush2.msra.mxu0 0.0
          %619 = vmatprep.subr.mxu0 0.0
          %620 = vmatpush2.msra.mxu0 0.0
          %621 = vmatprep.subr.mxu0 0.0
          %622 = vmatpush2.msra.mxu0 0.0
          %623 = vmatprep.subr.mxu0 0.0
          %624 = vmatpush2.msra.mxu0 0.0
          %625 = vmatprep.subr.mxu0 0.0
          %626 = vmatpush2.msra.mxu0 0.0
          %627 = vmatprep.subr.mxu0 0.0
          %628 = vmatpush2.msra.mxu0 0.0
          %629 = vmatprep.subr.mxu0 0.0
          %630 = vmatpush2.msra.mxu0 0.0
          %631 = vmatprep.subr.mxu0 0.0
          %632 = vmatpush2.msra.mxu0 0.0
          %633 = vmatprep.subr.mxu0 0.0
          %634 = vmatpush2.msra.mxu0 0.0
          %635 = vmatprep.subr.mxu0 0.0
          %636 = vmatpush2.msra.mxu0 0.0
          %637 = vmatprep.subr.mxu0 0.0
          %638 = vmatpush2.msra.mxu0 0.0
          %639 = vmatprep.subr.mxu0 0.0
          %640 = vmatpush2.msra.mxu0 0.0
          %641 = vmatprep.mubr.f32.mxu0 0.0
          %642 = vmatmul.mubr.f32.gmra.mxu0 %v538
          %v643 = vpop.f32.mrf.mxu0
          %v644 = vadd.f32 %v575, %v643
          %v645 = vpop.f32.mrf.mxu0
          %646 = vmatprep.mubr.f32.mxu0 0.0
          %647 = vmatmul.mubr.f32.gmra.mxu0 %v539
          %v648 = vpop.f32.mrf.mxu0
          %v649 = vadd.f32 %v575, %v648
          %v650 = vpop.f32.mrf.mxu0
          %651 = vmatprep.mubr.f32.mxu0 0.0
          %652 = vmatmul.mubr.f32.gmra.mxu0 %v540
          %v653 = vpop.f32.mrf.mxu0
          %v654 = vadd.f32 %v575, %v653
          %v655 = vpop.f32.mrf.mxu0
          %656 = vmatprep.mubr.f32.mxu0 0.0
          %657 = vmatmul.mubr.f32.gmra.mxu0 %v541
          %v658 = vpop.f32.mrf.mxu0
          %v659 = vadd.f32 %v575, %v658
          %v660 = vpop.f32.mrf.mxu0
          %661 = vmatprep.mubr.f32.mxu0 0.0
          %662 = vmatmul.mubr.f32.gmra.mxu0 %v542
          %v663 = vpop.f32.mrf.mxu0
          %v664 = vadd.f32 %v575, %v663
          %v665 = vpop.f32.mrf.mxu0
          %666 = vmatprep.mubr.f32.mxu0 0.0
          %667 = vmatmul.mubr.f32.gmra.mxu0 %v543
          %v668 = vpop.f32.mrf.mxu0
          %v669 = vadd.f32 %v575, %v668
          %v670 = vpop.f32.mrf.mxu0
          %671 = vmatprep.mubr.f32.mxu0 0.0
          %672 = vmatmul.mubr.f32.gmra.mxu0 %v544
          %v673 = vpop.f32.mrf.mxu0
          %v674 = vadd.f32 %v575, %v673
          %v675 = vpop.f32.mrf.mxu0
          %676 = vmatprep.mubr.f32.mxu0 0.0
          %677 = vmatmul.mubr.f32.gmra.mxu0 %v545
          %v678 = vpop.f32.mrf.mxu0
          %v679 = vadd.f32 %v575, %v678
          %v680 = vpop.f32.mrf.mxu0
          %681 = vmatprep.mubr.f32.mxu0 0.0
          %682 = vmatmul.mubr.f32.gmra.mxu0 %v546
          %v683 = vpop.f32.mrf.mxu0
          %v684 = vadd.f32 %v575, %v683
          %v685 = vpop.f32.mrf.mxu0
          %686 = vmatprep.mubr.f32.mxu0 0.0
          %687 = vmatmul.mubr.f32.gmra.mxu0 %v547
          %v688 = vpop.f32.mrf.mxu0
          %v689 = vadd.f32 %v575, %v688
          %v690 = vpop.f32.mrf.mxu0
          %691 = vmatprep.mubr.f32.mxu0 0.0
          %692 = vmatmul.mubr.f32.gmra.mxu0 %v548
          %v693 = vpop.f32.mrf.mxu0
          %v694 = vadd.f32 %v575, %v693
          %v695 = vpop.f32.mrf.mxu0
          %696 = vmatprep.mubr.f32.mxu0 0.0
          %697 = vmatmul.mubr.f32.gmra.mxu0 %v549
          %v698 = vpop.f32.mrf.mxu0
          %v699 = vadd.f32 %v575, %v698
          %v700 = vpop.f32.mrf.mxu0
          %701 = vmatprep.mubr.f32.mxu0 0.0
          %702 = vmatmul.mubr.f32.gmra.mxu0 %v550
          %v703 = vpop.f32.mrf.mxu0
          %v704 = vadd.f32 %v575, %v703
          %v705 = vpop.f32.mrf.mxu0
          %706 = vmatprep.mubr.f32.mxu0 0.0
          %707 = vmatmul.mubr.f32.gmra.mxu0 %v551
          %v708 = vpop.f32.mrf.mxu0
          %v709 = vadd.f32 %v575, %v708
          %v710 = vpop.f32.mrf.mxu0
          %711 = vmatprep.mubr.f32.mxu0 0.0
          %712 = vmatmul.mubr.f32.gmra.mxu0 %v552
          %v713 = vpop.f32.mrf.mxu0
          %v714 = vadd.f32 %v575, %v713
          %v715 = vpop.f32.mrf.mxu0
          %716 = vmatprep.mubr.f32.mxu0 0.0
          %717 = vmatmul.mubr.f32.gmra.mxu0 %v553
          %v718 = vpop.f32.mrf.mxu0
          %v719 = vadd.f32 %v575, %v718
          %v720 = vpop.f32.mrf.mxu0
          %721 = vdwg.mxu0
          %722 = vst [vmem:[%s285] sm:$0xff] %v644
          %723 = vst [vmem:[%s285 + $0x8] sm:$0xff] %v649
          %724 = vst [vmem:[%s285 + $0x10] sm:$0xff] %v654
          %725 = vst [vmem:[%s285 + $0x18] sm:$0xff] %v659
          %726 = vst [vmem:[%s285 + $0x20] sm:$0xff] %v664
          %727 = vst [vmem:[%s285 + $0x28] sm:$0xff] %v669
          %728 = vst [vmem:[%s285 + $0x30] sm:$0xff] %v674
          %729 = vst [vmem:[%s285 + $0x38] sm:$0xff] %v679
          %730 = vst [vmem:[%s285 + $0x40] sm:$0xff] %v684
          %731 = vst [vmem:[%s285 + $0x48] sm:$0xff] %v689
          %732 = vst [vmem:[%s285 + $0x50] sm:$0xff] %v694
          %733 = vst [vmem:[%s285 + $0x58] sm:$0xff] %v699
          %734 = vst [vmem:[%s285 + $0x60] sm:$0xff] %v704
          %735 = vst [vmem:[%s285 + $0x68] sm:$0xff] %v709
          %736 = vst [vmem:[%s285 + $0x70] sm:$0xff] %v714
          %737 = vst [vmem:[%s285 + $0x78] sm:$0xff] %v719
        $region56: #{tpu_custom_call.1} parent=35 // pred_fallthru
          _
        %s738 = sand.u32 %s140, 1
        %s739 = scalar_lea.sflag [#allocation5], %s738
        %s740 = sand.u32 %s140, 1
        %s741 = smul.addr %s740, 128
        %s742 = scalar_lea.vmem [#allocation9], %s741
        // Predicated region
        $region57: #{tpu_custom_call.1} parent=35 // pred_check
          %p743 = pneg %p150
        $region58: #{tpu_custom_call.1} parent=35 // pred_check_branch
          %745 = sbr.rel (%p743) target = $region60
        $region59: #{tpu_custom_call.1} parent=35 // pred_region
          %s746 = smul.u32 16, %s28
          %s748 = ssub.s32 2048, 2048
          %749 = vsyncadd %s739, %s748
          %s750 = smul.addr %s746, 128
          %s751 = scalar_lea.hbm %s4, %s750
          %s752 = sshll.u32 %s742, 4
          %s753 = int_to_ptr.vmem [resolvable:$true] %s752
          %758 = dma.vmem_to_hbm [thread:$0]  %s753, 2048, %s751, %s739, 128, 128, 8
        $region60: #{tpu_custom_call.1} parent=35 // pred_fallthru
          _
      $region36: #{tpu_custom_call.1} parent=5 // pred_fallthru
        _
      %p759 = scmp.le.s32.totalorder 2, %s19
      // Predicated region
      $region61: #{tpu_custom_call.1} parent=5 // pred_check
        %p760 = pneg %p759
      $region62: #{tpu_custom_call.1} parent=5 // pred_check_branch
        %762 = sbr.rel (%p760) target = $region64
      $region63: #{tpu_custom_call.1} parent=5 // pred_region
        %s763 = ssub.s32 %s19, 2
        // Predicated region
        $region65: #{tpu_custom_call.1} parent=63 // pred_check
          %p764 = pneg %p156
        $region66: #{tpu_custom_call.1} parent=63 // pred_check_branch
          %766 = sbr.rel (%p764) target = $region68
        $region67: #{tpu_custom_call.1} parent=63 // pred_region
          %s767 = sand.u32 %s141, 1
          %s768 = scalar_lea.sflag [#allocation5], %s767
          %s769 = sand.u32 %s141, 1
          %s770 = smul.addr %s769, 128
          %s771 = scalar_lea.vmem [#allocation9], %s770
          %772 = dma.done %s768, 2048
        $region68: #{tpu_custom_call.1} parent=63 // pred_fallthru
          _
      $region64: #{tpu_custom_call.1} parent=5 // pred_fallthru
        _
    $region6: #{tpu_custom_call.1} parent=1 // loop_footer
      %s23 = sadd.s32 1, %s19
    $region7: #{tpu_custom_call.1} parent=1 // loop_footer_branch
      %18 = sbr.rel target = $region3
    $region8: #{tpu_custom_call.1} parent=1 // loop_exit
      _
    %773 = vsyncpa [#allocation4], 1
    %s774 = scalar_lea.sflag [#allocation4], 1
    %775 = vsyncpa %s774, 1
    %776 = vsyncpa [#allocation7], 1
    %s777 = scalar_lea.sflag [#allocation7], 1
    %778 = vsyncpa %s777, 1
    %779 = vsyncpa [#allocation5], 1
    %s780 = scalar_lea.sflag [#allocation5], 1
    %781 = vsyncpa %s780, 1

</llo_original>
